<compile_context>
chip_gen: v6e
topology: v6e:2x2x1
jax: 0.10.0
libtpu: 0.0.40
codegen_flags: <defaults>
</compile_context>

<pallas_src>
import functools
import math

import jax
import jax.numpy as jnp
import numpy as np
from jax.experimental import pallas as pl
from jax.experimental.pallas import tpu as pltpu


def next_pow2(n: int) -> int:
    return int(2 ** math.ceil(math.log2(n)))


def _round_up(x: int, m: int) -> int:
    return (x + m - 1) // m * m


def _reconstruct_kernel(v_ref, c_ref, o_ref, *, M, N, mi, mj, off):
    """out = Re( Gm_sel @ (H * (F_M @ v @ F_N)) @ Gn_sel ).

    Gm_sel / Gn_sel are the inverse-DFT matrices with ifftshift and crop folded
    in (row/column selection done at init time); Gn's imaginary part is
    pre-negated so the epilogue is a single matmul.
    """
    f32 = jnp.float32
    dot = lambda a, b: jnp.dot(a, b, preferred_element_type=f32)

    def const(name, rows, cols):
        r0 = off[name]                         # static python int -> free sublane slice
        return c_ref[r0:r0 + rows, 0:cols]

    v = v_ref[...]                             # (M, N) real parameter

    fm = const("fm", 2 * M, M)                 # [Re F_M; Im F_M]              (2M, M)
    fn = const("fn", N, 2 * N)                 # [Re F_N | Im F_N]             (N, 2N)
    hr = const("hr", M, N)                     # Re H                          (M, N)
    hi = const("hi", M, N)                     # Im H                          (M, N)
    gm = const("gm", 2 * mi, M)                # [Re Gm_sel; Im Gm_sel]        (2mi, M)
    cn = const("cn", 2 * N, mj)                # [Re Gn_sel; -Im Gn_sel]       (2N, mj)

    # ---- Vk = F_M @ v @ F_N  (forward ortho DFT of the real parameter) ------
    s = dot(fm, v)                             # (2M, N)  = [Sr; Si]
    pq = dot(s, fn)                            # (2M, 2N) = [Sr@FNr | Sr@FNi ; Si@FNr | Si@FNi]
    vkr = pq[:M, :N] - pq[M:, N:]              # Re Vk   (sublane splits are free)
    vki = pq[:M, N:] + pq[M:, :N]              # Im Vk

    # ---- Y = H * Vk  (complex Hadamard on the VPU) ---------------------------
    yr = hr * vkr - hi * vki
    yi = hr * vki + hi * vkr
    y = jnp.concatenate([yr, yi], axis=-1)     # (M, 2N) = [Yr | Yi]

    # ---- out = Re(Gm_sel @ Y @ Gn_sel); ifftshift + crop already folded ------
    w = dot(gm, y)                             # (2mi, 2N)
    re_gy = w[:mi, :N] - w[mi:, N:]            # Re(Gm_sel @ Y)
    im_gy = w[:mi, N:] + w[mi:, :N]            # Im(Gm_sel @ Y)
    re_im = jnp.concatenate([re_gy, im_gy], axis=-1)   # (mi, 2N)
    o_ref[...] = dot(re_im, cn)                # (mi, mj): single fused epilogue matmul


class ImageReconstructorPallas:
    """JAX/Pallas re-implementation of the PyTorch ImageReconstructor.forward()."""

    def __init__(self, h):
        h_np = np.asarray(jax.device_get(jnp.asarray(h, jnp.float32)), np.float32)
        self.init_shape = tuple(int(s) for s in h_np.shape)
        self.padded_shape = [next_pow2(2 * n - 1) for n in self.init_shape]
        M, N = self.padded_shape
        mi, mj = self.init_shape
        # ifftshift is folded as an index roll by n//2 -> only valid for even dims.
        assert M % 2 == 0 and N % 2 == 0, "ifftshift fold assumes even padded dims"

        self.starti = (M - mi) // 2
        self.endi = self.starti + mi
        self.startj = N // 2 - mj // 2
        self.endj = self.startj + mj

        # -------- parameter / constant setup (init-time glue, plain numpy) ----
        hpad = np.zeros((M, N), np.float64)
        hpad[self.starti:self.endi, self.startj:self.endj] = h_np
        H_np = np.fft.fft2(hpad, norm="ortho")
        Hr = H_np.real.astype(np.float32)
        Hi = H_np.imag.astype(np.float32)
        self.H = jnp.asarray(H_np.astype(np.complex64))      # for the reference path
        self.v = jnp.asarray(Hr)                             # trainable parameter

        def dft_cos_sin(n):
            k = np.arange(n)
            ang = 2.0 * np.pi * np.outer(k, k) / n
            sc = 1.0 / math.sqrt(n)
            return (np.cos(ang) * sc).astype(np.float32), (np.sin(ang) * sc).astype(np.float32)

        cosM, sinM = dft_cos_sin(M)
        cosN, sinN = dft_cos_sin(N)
        FMr, FMi = cosM, -sinM                 # forward ortho DFT, size M
        FNr, FNi = cosN, -sinN                 # forward ortho DFT, size N

        # Inverse ortho DFT (= conj) with ifftshift + crop folded in:
        # out[i,j] = Re( Z[(starti+i+M//2) % M, (startj+j+N//2) % N] ).
        ridx = (self.starti + np.arange(mi) + M // 2) % M
        cidx = (self.startj + np.arange(mj) + N // 2) % N
        Ar, Ai = cosM[ridx, :], sinM[ridx, :]  # selected rows of G_M   (mi, M)
        Cr, Ci = cosN[:, cidx], sinN[:, cidx]  # selected cols of G_N   (N, mj)

        # -------- pack every constant into one SUBLANE-packed f32 slab --------
        # Each segment starts at an 8-aligned row offset and at lane 0, so the
        # in-kernel loads are free sublane slices (no lane-shift relayouts).
        segs = [
            ("fm", np.concatenate([FMr, FMi], axis=0)),     # (2M, M)
            ("fn", np.concatenate([FNr, FNi], axis=1)),     # (N, 2N)
            ("hr", Hr),                                     # (M, N)
            ("hi", Hi),                                     # (M, N)
            ("gm", np.concatenate([Ar, Ai], axis=0)),       # (2mi, M)
            ("cn", np.concatenate([Cr, -Ci], axis=0)),      # (2N, mj)  (Ci pre-negated!)
        ]
        width = max(a.shape[1] for _, a in segs)
        off, row = {}, 0
        for name, a in segs:
            off[name] = int(row)
            row += _round_up(a.shape[0], 8)
        slab = np.zeros((_round_up(row, 8), width), np.float32)
        for name, a in segs:
            r0 = off[name]
            slab[r0:r0 + a.shape[0], :a.shape[1]] = a
        self._slab = jnp.asarray(slab)

        kernel = functools.partial(_reconstruct_kernel, M=M, N=N, mi=mi, mj=mj, off=off)

        flops = int(
            2 * (2 * M) * M * N                # [FMr;FMi] @ v
            + 2 * (2 * M) * N * (2 * N)        # s @ [FNr|FNi]
            + 2 * (2 * mi) * M * (2 * N)       # [Ar;Ai] @ [Yr|Yi]
            + 2 * mi * (2 * N) * mj            # [re|im] @ [Cr;-Ci]
            + 14 * M * N                       # Hadamard + recombines (VPU)
        )
        bytes_accessed = int(4 * (M * N + slab.size + mi * mj))

        vmem = pl.BlockSpec(memory_space=pltpu.MemorySpace.VMEM)
        self._call = pl.pallas_call(
            kernel,
            out_shape=jax.ShapeDtypeStruct((mi, mj), jnp.float32),
            in_specs=[vmem, vmem],
            out_specs=vmem,
            cost_estimate=pl.CostEstimate(
                flops=flops, transcendentals=0, bytes_accessed=bytes_accessed),
        )
        # Keep the tiny custom call inside jit so per-call dispatch overhead
        # (which dwarfs the ~µs kernel) is paid once at trace time.
        self._forward = jax.jit(self._call)

    def forward(self) -> jnp.ndarray:
        return self._forward(self.v, self._slab)

    # pure-JAX reference for verification
    def forward_ref(self) -> jnp.ndarray:
        Vk = jnp.fft.fft2(self.v, norm="ortho")
        rec = jnp.fft.ifftshift(jnp.fft.ifft2(self.H * Vk, norm="ortho"))
        return jnp.real(rec[self.starti:self.endi, self.startj:self.endj])


if __name__ == "__main__":
    key = jax.random.PRNGKey(0)
    h = jax.random.normal(key, (16, 16), dtype=jnp.float32)   # small PSF

    model = ImageReconstructorPallas(h)
    out = jax.block_until_ready(model.forward())

    ref = model.forward_ref()
    assert out.shape == model.init_shape, (out.shape, model.init_shape)
    np.testing.assert_allclose(np.asarray(out), np.asarray(ref),
                               rtol=1e-3, atol=1e-4)
    print("KERNEL_OK")
</pallas_src>

<mosaic_0001>
module attributes {stable_mosaic.version = 11 : i64} {
  func.func @_reconstruct_kernel(%arg0: memref<32x32xf32, #tpu.memory_space<vmem>>, %arg1: memref<256x64xf32, #tpu.memory_space<vmem>>, %arg2: memref<16x16xf32, #tpu.memory_space<vmem>>) attributes {dimension_semantics = [], scalar_prefetch = 0 : i64, scratch_operands = 0 : i64, tpu.core_type = #tpu.core_type<tc>} {
    %c0 = arith.constant 0 : index
    %c0_0 = arith.constant 0 : index
    %0 = vector.load %arg0[%c0, %c0_0] : memref<32x32xf32, #tpu.memory_space<vmem>>, vector<32x32xf32>
    %c0_1 = arith.constant 0 : index
    %c0_2 = arith.constant 0 : index
    %1 = vector.load %arg1[%c0_1, %c0_2] : memref<256x64xf32, #tpu.memory_space<vmem>>, vector<64x32xf32>
    %c64 = arith.constant 64 : index
    %c0_3 = arith.constant 0 : index
    %2 = vector.load %arg1[%c64, %c0_3] : memref<256x64xf32, #tpu.memory_space<vmem>>, vector<32x64xf32>
    %c96 = arith.constant 96 : index
    %c0_4 = arith.constant 0 : index
    %3 = vector.load %arg1[%c96, %c0_4] : memref<256x64xf32, #tpu.memory_space<vmem>>, vector<32x32xf32>
    %c128 = arith.constant 128 : index
    %c0_5 = arith.constant 0 : index
    %4 = vector.load %arg1[%c128, %c0_5] : memref<256x64xf32, #tpu.memory_space<vmem>>, vector<32x32xf32>
    %c160 = arith.constant 160 : index
    %c0_6 = arith.constant 0 : index
    %5 = vector.load %arg1[%c160, %c0_6] : memref<256x64xf32, #tpu.memory_space<vmem>>, vector<32x32xf32>
    %c192 = arith.constant 192 : index
    %c0_7 = arith.constant 0 : index
    %6 = vector.load %arg1[%c192, %c0_7] : memref<256x64xf32, #tpu.memory_space<vmem>>, vector<64x16xf32>
    %cst = arith.constant dense<0.000000e+00> : vector<64x32xf32>
    %7 = tpu.matmul %1, %0, %cst {dimension_numbers = #tpu.dot_dimension_numbers<[1], [0], [0], [1], [0, 0, 1, 1], [], []>} : vector<64x32xf32>, vector<32x32xf32>, vector<64x32xf32> -> vector<64x32xf32>
    %cst_8 = arith.constant dense<0.000000e+00> : vector<64x64xf32>
    %8 = tpu.matmul %7, %2, %cst_8 {dimension_numbers = #tpu.dot_dimension_numbers<[1], [0], [0], [1], [0, 0, 1, 1], [], []>} : vector<64x32xf32>, vector<32x64xf32>, vector<64x64xf32> -> vector<64x64xf32>
    %9 = vector.extract_strided_slice %8 {offsets = [0, 0], sizes = [32, 32], strides = [1, 1]} : vector<64x64xf32> to vector<32x32xf32>
    %10 = vector.extract_strided_slice %8 {offsets = [32, 32], sizes = [32, 32], strides = [1, 1]} : vector<64x64xf32> to vector<32x32xf32>
    %11 = arith.subf %9, %10 : vector<32x32xf32>
    %12 = vector.extract_strided_slice %8 {offsets = [0, 32], sizes = [32, 32], strides = [1, 1]} : vector<64x64xf32> to vector<32x32xf32>
    %13 = vector.extract_strided_slice %8 {offsets = [32, 0], sizes = [32, 32], strides = [1, 1]} : vector<64x64xf32> to vector<32x32xf32>
    %14 = arith.addf %12, %13 : vector<32x32xf32>
    %15 = arith.mulf %3, %11 : vector<32x32xf32>
    %16 = arith.mulf %4, %14 : vector<32x32xf32>
    %17 = arith.subf %15, %16 : vector<32x32xf32>
    %18 = arith.mulf %3, %14 : vector<32x32xf32>
    %19 = arith.mulf %4, %11 : vector<32x32xf32>
    %20 = arith.addf %18, %19 : vector<32x32xf32>
    %21 = tpu.concatenate %17, %20 in 1 : vector<32x32xf32>, vector<32x32xf32> -> vector<32x64xf32>
    %cst_9 = arith.constant dense<0.000000e+00> : vector<32x64xf32>
    %22 = tpu.matmul %5, %21, %cst_9 {dimension_numbers = #tpu.dot_dimension_numbers<[1], [0], [0], [1], [0, 0, 1, 1], [], []>} : vector<32x32xf32>, vector<32x64xf32>, vector<32x64xf32> -> vector<32x64xf32>
    %23 = vector.extract_strided_slice %22 {offsets = [0, 0], sizes = [16, 32], strides = [1, 1]} : vector<32x64xf32> to vector<16x32xf32>
    %24 = vector.extract_strided_slice %22 {offsets = [16, 32], sizes = [16, 32], strides = [1, 1]} : vector<32x64xf32> to vector<16x32xf32>
    %25 = arith.subf %23, %24 : vector<16x32xf32>
    %26 = vector.extract_strided_slice %22 {offsets = [0, 32], sizes = [16, 32], strides = [1, 1]} : vector<32x64xf32> to vector<16x32xf32>
    %27 = vector.extract_strided_slice %22 {offsets = [16, 0], sizes = [16, 32], strides = [1, 1]} : vector<32x64xf32> to vector<16x32xf32>
    %28 = arith.addf %26, %27 : vector<16x32xf32>
    %29 = tpu.concatenate %25, %28 in 1 : vector<16x32xf32>, vector<16x32xf32> -> vector<16x64xf32>
    %cst_10 = arith.constant dense<0.000000e+00> : vector<16x16xf32>
    %30 = tpu.matmul %29, %6, %cst_10 {dimension_numbers = #tpu.dot_dimension_numbers<[1], [0], [0], [1], [0, 0, 1, 1], [], []>} : vector<16x64xf32>, vector<64x16xf32>, vector<16x16xf32> -> vector<16x16xf32>
    %c0_11 = arith.constant 0 : index
    %c0_12 = arith.constant 0 : index
    %31 = vector.load %arg2[%c0_11, %c0_12] : memref<16x16xf32, #tpu.memory_space<vmem>>, vector<16x16xf32>
    tpu.vector_store %arg2[%c0_11, %c0_12], %30 {strides = array<i32>} : memref<16x16xf32, #tpu.memory_space<vmem>>, vector<16x16xf32>,
    return
  }
}

</mosaic_0001>

<llo_original>
// kernel: tpu_custom_call.1
$region0: #{tpu_custom_call.1}
  #allocation0 [shape = 'u32[]', space=smem, size = 0x4, offset = 0x4, fixed_abs, tag = 'smem constant byte address 0x4 - core index']
  #allocation1 [shape = 'u32[144,128]{1,0:T(1,128)}', space=vmem, size = 0x12000, scoped, tag = 'internal scratch']
  %s0 = inlined_call_operand.vmem [shape: f32[32,32], index: 0, kind: input, shape index: {}]
  %s1 = inlined_call_operand.vmem [shape: f32[256,64], index: 1, kind: input, shape index: {}]
  %s2 = inlined_call_operand.hbm [shape: f32[16,16], index: 2, kind: output, shape index: {}]
  %s3 = sld [smem:[#allocation0]]
  $region18: #{tpu_custom_call.1} parent=0
    _
  %s5 = ssub.s32 1, %s3
  %s6 = scalar_select 0, %s5, %s3
  $region1: #{tpu_custom_call.1} parent=0
    #allocation2 [shape = 'u8[8192]{0}', space=vmem, size = 0x2000, scoped, tag = 'output window, operand 0, single buffered']
    #allocation3 [shape = 's32[1]{0}', space=sflag, size = 0x4, scoped, tag = 'scoped memory for tpu_custom_call.1']
    %7 = vsyncpa [#allocation3], 0
    // Predicated region
    $region2: #{tpu_custom_call.1} parent=1 // pred_check
      _
    $region3: #{tpu_custom_call.1} parent=1 // pred_check_branch
      %9 = sbr.rel (0) target = $region5
    $region4: #{tpu_custom_call.1} parent=1 // pred_region
      _
    $region5: #{tpu_custom_call.1} parent=1 // pred_fallthru
      _
    // Predicated region
    $region6: #{tpu_custom_call.1} parent=1 // pred_check
      _
    $region7: #{tpu_custom_call.1} parent=1 // pred_check_branch
      %11 = sbr.rel (0) target = $region9
    $region8: #{tpu_custom_call.1} parent=1 // pred_region
      _
    $region9: #{tpu_custom_call.1} parent=1 // pred_fallthru
      _
    %v12 = vld [vmem:[%s0] sm:$0xff]
    %v13 = vld [vmem:[%s0 + $0x8] sm:$0xff]
    %v14 = vld [vmem:[%s0 + $0x10] sm:$0xff]
    %v15 = vld [vmem:[%s0 + $0x18] sm:$0xff]
    %v16 = vld [vmem:[%s1] sm:$0xff]
    %v17 = vld [vmem:[%s1 + $0x8] sm:$0xff]
    %v18 = vld [vmem:[%s1 + $0x10] sm:$0xff]
    %v19 = vld [vmem:[%s1 + $0x18] sm:$0xff]
    %v20 = vld [vmem:[%s1 + $0x20] sm:$0xff]
    %v21 = vld [vmem:[%s1 + $0x28] sm:$0xff]
    %v22 = vld [vmem:[%s1 + $0x30] sm:$0xff]
    %v23 = vld [vmem:[%s1 + $0x38] sm:$0xff]
    %v24 = vld [vmem:[%s1 + $0x40] sm:$0xff]
    %v25 = vld [vmem:[%s1 + $0x48] sm:$0xff]
    %v26 = vld [vmem:[%s1 + $0x50] sm:$0xff]
    %v27 = vld [vmem:[%s1 + $0x58] sm:$0xff]
    %v28 = vld [vmem:[%s1 + $0x60] sm:$0xff]
    %v29 = vld [vmem:[%s1 + $0x68] sm:$0xff]
    %v30 = vld [vmem:[%s1 + $0x70] sm:$0xff]
    %v31 = vld [vmem:[%s1 + $0x78] sm:$0xff]
    %v32 = vld [vmem:[%s1 + $0x80] sm:$0xff]
    %v33 = vld [vmem:[%s1 + $0x88] sm:$0xff]
    %v34 = vld [vmem:[%s1 + $0x90] sm:$0xff]
    %v35 = vld [vmem:[%s1 + $0x98] sm:$0xff]
    %v36 = vld [vmem:[%s1 + $0xa0] sm:$0xff]
    %v37 = vld [vmem:[%s1 + $0xa8] sm:$0xff]
    %v38 = vld [vmem:[%s1 + $0xb0] sm:$0xff]
    %v39 = vld [vmem:[%s1 + $0xb8] sm:$0xff]
    %v40 = vld [vmem:[%s1 + $0xc0] sm:$0xff]
    %v41 = vld [vmem:[%s1 + $0xc8] sm:$0xff]
    %v42 = vld [vmem:[%s1 + $0xd0] sm:$0xff]
    %v43 = vld [vmem:[%s1 + $0xd8] sm:$0xff]
    %v44 = vld [vmem:[%s1 + $0xe0] sm:$0xff]
    %v45 = vld [vmem:[%s1 + $0xe8] sm:$0xff]
    %v46 = vld [vmem:[%s1 + $0xf0] sm:$0xff]
    %v47 = vld [vmem:[%s1 + $0xf8] sm:$0xff]
    %vm48 = vcmask 261120
    %v50 = vsel %vm48, %v16, 0
    %v53 = vsel %vm48, %v17, 0
    %v56 = vsel %vm48, %v18, 0
    %v59 = vsel %vm48, %v19, 0
    %v62 = vsel %vm48, %v20, 0
    %v65 = vsel %vm48, %v21, 0
    %v68 = vsel %vm48, %v22, 0
    %v71 = vsel %vm48, %v23, 0
    %73 = vmatprep.subr.mxu0 0.0
    %74 = vmatpush1.msra.mxu0 0.0
    %75 = vmatprep.subr.mxu0 0.0
    %76 = vmatpush1.msra.mxu0 0.0
    %77 = vmatprep.subr.mxu0 0.0
    %78 = vmatpush1.msra.mxu0 0.0
    %79 = vmatprep.subr.mxu0 0.0
    %80 = vmatpush1.msra.mxu0 0.0
    %81 = vmatprep.subr.mxu0 0.0
    %82 = vmatpush1.msra.mxu0 0.0
    %83 = vmatprep.subr.mxu0 0.0
    %84 = vmatpush1.msra.mxu0 0.0
    %85 = vmatprep.subr.mxu0 0.0
    %86 = vmatpush1.msra.mxu0 0.0
    %87 = vmatprep.subr.mxu0 0.0
    %88 = vmatpush1.msra.mxu0 0.0
    %89 = vmatprep.subr.mxu0 0.0
    %90 = vmatpush1.msra.mxu0 0.0
    %91 = vmatprep.subr.mxu0 0.0
    %92 = vmatpush1.msra.mxu0 0.0
    %93 = vmatprep.subr.mxu0 0.0
    %94 = vmatpush1.msra.mxu0 0.0
    %95 = vmatprep.subr.mxu0 0.0
    %96 = vmatpush1.msra.mxu0 0.0
    %97 = vmatprep.subr.mxu0 0.0
    %98 = vmatpush1.msra.mxu0 %v15
    %99 = vmatprep.subr.mxu0 0.0
    %100 = vmatpush1.msra.mxu0 %v14
    %101 = vmatprep.subr.mxu0 0.0
    %102 = vmatpush1.msra.mxu0 %v13
    %103 = vmatprep.subr.mxu0 0.0
    %104 = vmatpush1.msra.mxu0 %v12
    %105 = vmatprep.subr.mxu0 0.0
    %106 = vmatpush2.msra.mxu0 0.0
    %107 = vmatprep.subr.mxu0 0.0
    %108 = vmatpush2.msra.mxu0 0.0
    %109 = vmatprep.subr.mxu0 0.0
    %110 = vmatpush2.msra.mxu0 0.0
    %111 = vmatprep.subr.mxu0 0.0
    %112 = vmatpush2.msra.mxu0 0.0
    %113 = vmatprep.subr.mxu0 0.0
    %114 = vmatpush2.msra.mxu0 0.0
    %115 = vmatprep.subr.mxu0 0.0
    %116 = vmatpush2.msra.mxu0 0.0
    %117 = vmatprep.subr.mxu0 0.0
    %118 = vmatpush2.msra.mxu0 0.0
    %119 = vmatprep.subr.mxu0 0.0
    %120 = vmatpush2.msra.mxu0 0.0
    %121 = vmatprep.subr.mxu0 0.0
    %122 = vmatpush2.msra.mxu0 0.0
    %123 = vmatprep.subr.mxu0 0.0
    %124 = vmatpush2.msra.mxu0 0.0
    %125 = vmatprep.subr.mxu0 0.0
    %126 = vmatpush2.msra.mxu0 0.0
    %127 = vmatprep.subr.mxu0 0.0
    %128 = vmatpush2.msra.mxu0 0.0
    %129 = vmatprep.subr.mxu0 0.0
    %130 = vmatpush2.msra.mxu0 0.0
    %131 = vmatprep.subr.mxu0 0.0
    %132 = vmatpush2.msra.mxu0 0.0
    %133 = vmatprep.subr.mxu0 0.0
    %134 = vmatpush2.msra.mxu0 0.0
    %135 = vmatprep.subr.mxu0 0.0
    %136 = vmatpush2.msra.mxu0 0.0
    %137 = vmatprep.mubr.f32.mxu0 0.0
    %138 = vmatmul.mubr.f32.gmra.mxu0 %v50
    %v139 = vpop.f32.mrf.mxu0
    %v140 = vadd.f32 0.0, %v139
    %v141 = vpop.f32.mrf.mxu0
    %142 = vmatprep.mubr.f32.mxu0 0.0
    %143 = vmatmul.mubr.f32.gmra.mxu0 %v53
    %v144 = vpop.f32.mrf.mxu0
    %v145 = vadd.f32 0.0, %v144
    %v146 = vpop.f32.mrf.mxu0
    %147 = vmatprep.mubr.f32.mxu0 0.0
    %148 = vmatmul.mubr.f32.gmra.mxu0 %v56
    %v149 = vpop.f32.mrf.mxu0
    %v150 = vadd.f32 0.0, %v149
    %v151 = vpop.f32.mrf.mxu0
    %152 = vmatprep.mubr.f32.mxu0 0.0
    %153 = vmatmul.mubr.f32.gmra.mxu0 %v59
    %v154 = vpop.f32.mrf.mxu0
    %v155 = vadd.f32 0.0, %v154
    %v156 = vpop.f32.mrf.mxu0
    %157 = vmatprep.mubr.f32.mxu0 0.0
    %158 = vmatmul.mubr.f32.gmra.mxu0 %v62
    %v159 = vpop.f32.mrf.mxu0
    %v160 = vadd.f32 0.0, %v159
    %v161 = vpop.f32.mrf.mxu0
    %162 = vmatprep.mubr.f32.mxu0 0.0
    %163 = vmatmul.mubr.f32.gmra.mxu0 %v65
    %v164 = vpop.f32.mrf.mxu0
    %v165 = vadd.f32 0.0, %v164
    %v166 = vpop.f32.mrf.mxu0
    %167 = vmatprep.mubr.f32.mxu0 0.0
    %168 = vmatmul.mubr.f32.gmra.mxu0 %v68
    %v169 = vpop.f32.mrf.mxu0
    %v170 = vadd.f32 0.0, %v169
    %v171 = vpop.f32.mrf.mxu0
    %172 = vmatprep.mubr.f32.mxu0 0.0
    %173 = vmatmul.mubr.f32.gmra.mxu0 %v71
    %v174 = vpop.f32.mrf.mxu0
    %v175 = vadd.f32 0.0, %v174
    %v176 = vpop.f32.mrf.mxu0
    %177 = vdwg.mxu0
    %v179 = vsel %vm48, %v140, 0
    %v182 = vsel %vm48, %v145, 0
    %v185 = vsel %vm48, %v150, 0
    %v188 = vsel %vm48, %v155, 0
    %v191 = vsel %vm48, %v160, 0
    %v194 = vsel %vm48, %v165, 0
    %v197 = vsel %vm48, %v170, 0
    %v200 = vsel %vm48, %v175, 0
    %202 = vmatprep.subr.mxu0 0.0
    %203 = vmatpush1.msra.mxu0 0.0
    %204 = vmatprep.subr.mxu0 0.0
    %205 = vmatpush1.msra.mxu0 0.0
    %206 = vmatprep.subr.mxu0 0.0
    %207 = vmatpush1.msra.mxu0 0.0
    %208 = vmatprep.subr.mxu0 0.0
    %209 = vmatpush1.msra.mxu0 0.0
    %210 = vmatprep.subr.mxu0 0.0
    %211 = vmatpush1.msra.mxu0 0.0
    %212 = vmatprep.subr.mxu0 0.0
    %213 = vmatpush1.msra.mxu0 0.0
    %214 = vmatprep.subr.mxu0 0.0
    %215 = vmatpush1.msra.mxu0 0.0
    %216 = vmatprep.subr.mxu0 0.0
    %217 = vmatpush1.msra.mxu0 0.0
    %218 = vmatprep.subr.mxu0 0.0
    %219 = vmatpush1.msra.mxu0 0.0
    %220 = vmatprep.subr.mxu0 0.0
    %221 = vmatpush1.msra.mxu0 0.0
    %222 = vmatprep.subr.mxu0 0.0
    %223 = vmatpush1.msra.mxu0 0.0
    %224 = vmatprep.subr.mxu0 0.0
    %225 = vmatpush1.msra.mxu0 0.0
    %226 = vmatprep.subr.mxu0 0.0
    %227 = vmatpush1.msra.mxu0 %v27
    %228 = vmatprep.subr.mxu0 0.0
    %229 = vmatpush1.msra.mxu0 %v26
    %230 = vmatprep.subr.mxu0 0.0
    %231 = vmatpush1.msra.mxu0 %v25
    %232 = vmatprep.subr.mxu0 0.0
    %233 = vmatpush1.msra.mxu0 %v24
    %234 = vmatprep.subr.mxu0 0.0
    %235 = vmatpush2.msra.mxu0 0.0
    %236 = vmatprep.subr.mxu0 0.0
    %237 = vmatpush2.msra.mxu0 0.0
    %238 = vmatprep.subr.mxu0 0.0
    %239 = vmatpush2.msra.mxu0 0.0
    %240 = vmatprep.subr.mxu0 0.0
    %241 = vmatpush2.msra.mxu0 0.0
    %242 = vmatprep.subr.mxu0 0.0
    %243 = vmatpush2.msra.mxu0 0.0
    %244 = vmatprep.subr.mxu0 0.0
    %245 = vmatpush2.msra.mxu0 0.0
    %246 = vmatprep.subr.mxu0 0.0
    %247 = vmatpush2.msra.mxu0 0.0
    %248 = vmatprep.subr.mxu0 0.0
    %249 = vmatpush2.msra.mxu0 0.0
    %250 = vmatprep.subr.mxu0 0.0
    %251 = vmatpush2.msra.mxu0 0.0
    %252 = vmatprep.subr.mxu0 0.0
    %253 = vmatpush2.msra.mxu0 0.0
    %254 = vmatprep.subr.mxu0 0.0
    %255 = vmatpush2.msra.mxu0 0.0
    %256 = vmatprep.subr.mxu0 0.0
    %257 = vmatpush2.msra.mxu0 0.0
    %258 = vmatprep.subr.mxu0 0.0
    %259 = vmatpush2.msra.mxu0 0.0
    %260 = vmatprep.subr.mxu0 0.0
    %261 = vmatpush2.msra.mxu0 0.0
    %262 = vmatprep.subr.mxu0 0.0
    %263 = vmatpush2.msra.mxu0 0.0
    %264 = vmatprep.subr.mxu0 0.0
    %265 = vmatpush2.msra.mxu0 0.0
    %266 = vmatprep.mubr.f32.mxu0 0.0
    %267 = vmatmul.mubr.f32.gmra.mxu0 %v179
    %v268 = vpop.f32.mrf.mxu0
    %v269 = vadd.f32 0.0, %v268
    %v270 = vpop.f32.mrf.mxu0
    %271 = vmatprep.mubr.f32.mxu0 0.0
    %272 = vmatmul.mubr.f32.gmra.mxu0 %v182
    %v273 = vpop.f32.mrf.mxu0
    %v274 = vadd.f32 0.0, %v273
    %v275 = vpop.f32.mrf.mxu0
    %276 = vmatprep.mubr.f32.mxu0 0.0
    %277 = vmatmul.mubr.f32.gmra.mxu0 %v185
    %v278 = vpop.f32.mrf.mxu0
    %v279 = vadd.f32 0.0, %v278
    %v280 = vpop.f32.mrf.mxu0
    %281 = vmatprep.mubr.f32.mxu0 0.0
    %282 = vmatmul.mubr.f32.gmra.mxu0 %v188
    %v283 = vpop.f32.mrf.mxu0
    %v284 = vadd.f32 0.0, %v283
    %v285 = vpop.f32.mrf.mxu0
    %286 = vmatprep.mubr.f32.mxu0 0.0
    %287 = vmatmul.mubr.f32.gmra.mxu0 %v191
    %v288 = vpop.f32.mrf.mxu0
    %v289 = vadd.f32 0.0, %v288
    %v290 = vpop.f32.mrf.mxu0
    %291 = vmatprep.mubr.f32.mxu0 0.0
    %292 = vmatmul.mubr.f32.gmra.mxu0 %v194
    %v293 = vpop.f32.mrf.mxu0
    %v294 = vadd.f32 0.0, %v293
    %v295 = vpop.f32.mrf.mxu0
    %296 = vmatprep.mubr.f32.mxu0 0.0
    %297 = vmatmul.mubr.f32.gmra.mxu0 %v197
    %v298 = vpop.f32.mrf.mxu0
    %v299 = vadd.f32 0.0, %v298
    %v300 = vpop.f32.mrf.mxu0
    %301 = vmatprep.mubr.f32.mxu0 0.0
    %302 = vmatmul.mubr.f32.gmra.mxu0 %v200
    %v303 = vpop.f32.mrf.mxu0
    %v304 = vadd.f32 0.0, %v303
    %v305 = vpop.f32.mrf.mxu0
    %306 = vdwg.mxu0
    %311 = vrot.lane.b32.xlu0 %v289, 96
    %v312 = vpop.permute.xlu0 %311
    %313 = vrot.lane.b32.xlu0 %v294, 96
    %v314 = vpop.permute.xlu0 %313
    %315 = vrot.lane.b32.xlu0 %v299, 96
    %v316 = vpop.permute.xlu0 %315
    %317 = vrot.lane.b32.xlu0 %v304, 96
    %v318 = vpop.permute.xlu0 %317
    %v323 = vsub.f32 %v269, %v312
    %v324 = vsub.f32 %v274, %v314
    %v325 = vsub.f32 %v279, %v316
    %v326 = vsub.f32 %v284, %v318
    %327 = vrot.lane.b32.xlu0 %v289, 32
    %v328 = vpop.permute.xlu0 %327
    %329 = vrot.lane.b32.xlu0 %v294, 32
    %v330 = vpop.permute.xlu0 %329
    %331 = vrot.lane.b32.xlu0 %v299, 32
    %v332 = vpop.permute.xlu0 %331
    %333 = vrot.lane.b32.xlu0 %v304, 32
    %v334 = vpop.permute.xlu0 %333
    %v339 = vadd.f32 %v269, %v328
    %v340 = vadd.f32 %v274, %v330
    %v341 = vadd.f32 %v279, %v332
    %v342 = vadd.f32 %v284, %v334
    %v343 = vmul.f32 %v28, %v323
    %v344 = vmul.f32 %v29, %v324
    %v345 = vmul.f32 %v30, %v325
    %v346 = vmul.f32 %v31, %v326
    %351 = vrot.lane.b32.xlu0 %v339, 96
    %v352 = vpop.permute.xlu0 %351
    %353 = vrot.lane.b32.xlu0 %v340, 96
    %v354 = vpop.permute.xlu0 %353
    %355 = vrot.lane.b32.xlu0 %v341, 96
    %v356 = vpop.permute.xlu0 %355
    %357 = vrot.lane.b32.xlu0 %v342, 96
    %v358 = vpop.permute.xlu0 %357
    %v363 = vmul.f32 %v32, %v352
    %v364 = vmul.f32 %v33, %v354
    %v365 = vmul.f32 %v34, %v356
    %v366 = vmul.f32 %v35, %v358
    %v367 = vsub.f32 %v343, %v363
    %v368 = vsub.f32 %v344, %v364
    %v369 = vsub.f32 %v345, %v365
    %v370 = vsub.f32 %v346, %v366
    %v371 = vmul.f32 %v28, %v352
    %v372 = vmul.f32 %v29, %v354
    %v373 = vmul.f32 %v30, %v356
    %v374 = vmul.f32 %v31, %v358
    %v375 = vmul.f32 %v32, %v323
    %v376 = vmul.f32 %v33, %v324
    %v377 = vmul.f32 %v34, %v325
    %v378 = vmul.f32 %v35, %v326
    %v379 = vadd.f32 %v371, %v375
    %v380 = vadd.f32 %v372, %v376
    %v381 = vadd.f32 %v373, %v377
    %v382 = vadd.f32 %v374, %v378
    %387 = vrot.lane.b32.xlu0 %v379, 32
    %v388 = vpop.permute.xlu0 %387
    %389 = vrot.lane.b32.xlu0 %v380, 32
    %v390 = vpop.permute.xlu0 %389
    %391 = vrot.lane.b32.xlu0 %v381, 32
    %v392 = vpop.permute.xlu0 %391
    %393 = vrot.lane.b32.xlu0 %v382, 32
    %v394 = vpop.permute.xlu0 %393
    %v399 = vsel %vm48, %v367, %v388
    %v400 = vsel %vm48, %v368, %v390
    %v401 = vsel %vm48, %v369, %v392
    %v402 = vsel %vm48, %v370, %v394
    %v404 = vsel %vm48, %v36, 0
    %v407 = vsel %vm48, %v37, 0
    %v410 = vsel %vm48, %v38, 0
    %v413 = vsel %vm48, %v39, 0
    %415 = vmatprep.subr.mxu0 0.0
    %416 = vmatpush1.msra.mxu0 0.0
    %417 = vmatprep.subr.mxu0 0.0
    %418 = vmatpush1.msra.mxu0 0.0
    %419 = vmatprep.subr.mxu0 0.0
    %420 = vmatpush1.msra.mxu0 0.0
    %421 = vmatprep.subr.mxu0 0.0
    %422 = vmatpush1.msra.mxu0 0.0
    %423 = vmatprep.subr.mxu0 0.0
    %424 = vmatpush1.msra.mxu0 0.0
    %425 = vmatprep.subr.mxu0 0.0
    %426 = vmatpush1.msra.mxu0 0.0
    %427 = vmatprep.subr.mxu0 0.0
    %428 = vmatpush1.msra.mxu0 0.0
    %429 = vmatprep.subr.mxu0 0.0
    %430 = vmatpush1.msra.mxu0 0.0
    %431 = vmatprep.subr.mxu0 0.0
    %432 = vmatpush1.msra.mxu0 0.0
    %433 = vmatprep.subr.mxu0 0.0
    %434 = vmatpush1.msra.mxu0 0.0
    %435 = vmatprep.subr.mxu0 0.0
    %436 = vmatpush1.msra.mxu0 0.0
    %437 = vmatprep.subr.mxu0 0.0
    %438 = vmatpush1.msra.mxu0 0.0
    %439 = vmatprep.subr.mxu0 0.0
    %440 = vmatpush1.msra.mxu0 %v402
    %441 = vmatprep.subr.mxu0 0.0
    %442 = vmatpush1.msra.mxu0 %v401
    %443 = vmatprep.subr.mxu0 0.0
    %444 = vmatpush1.msra.mxu0 %v400
    %445 = vmatprep.subr.mxu0 0.0
    %446 = vmatpush1.msra.mxu0 %v399
    %447 = vmatprep.subr.mxu0 0.0
    %448 = vmatpush2.msra.mxu0 0.0
    %449 = vmatprep.subr.mxu0 0.0
    %450 = vmatpush2.msra.mxu0 0.0
    %451 = vmatprep.subr.mxu0 0.0
    %452 = vmatpush2.msra.mxu0 0.0
    %453 = vmatprep.subr.mxu0 0.0
    %454 = vmatpush2.msra.mxu0 0.0
    %455 = vmatprep.subr.mxu0 0.0
    %456 = vmatpush2.msra.mxu0 0.0
    %457 = vmatprep.subr.mxu0 0.0
    %458 = vmatpush2.msra.mxu0 0.0
    %459 = vmatprep.subr.mxu0 0.0
    %460 = vmatpush2.msra.mxu0 0.0
    %461 = vmatprep.subr.mxu0 0.0
    %462 = vmatpush2.msra.mxu0 0.0
    %463 = vmatprep.subr.mxu0 0.0
    %464 = vmatpush2.msra.mxu0 0.0
    %465 = vmatprep.subr.mxu0 0.0
    %466 = vmatpush2.msra.mxu0 0.0
    %467 = vmatprep.subr.mxu0 0.0
    %468 = vmatpush2.msra.mxu0 0.0
    %469 = vmatprep.subr.mxu0 0.0
    %470 = vmatpush2.msra.mxu0 0.0
    %471 = vmatprep.subr.mxu0 0.0
    %472 = vmatpush2.msra.mxu0 0.0
    %473 = vmatprep.subr.mxu0 0.0
    %474 = vmatpush2.msra.mxu0 0.0
    %475 = vmatprep.subr.mxu0 0.0
    %476 = vmatpush2.msra.mxu0 0.0
    %477 = vmatprep.subr.mxu0 0.0
    %478 = vmatpush2.msra.mxu0 0.0
    %479 = vmatprep.mubr.f32.mxu0 0.0
    %480 = vmatmul.mubr.f32.gmra.mxu0 %v404
    %v481 = vpop.f32.mrf.mxu0
    %v482 = vadd.f32 0.0, %v481
    %v483 = vpop.f32.mrf.mxu0
    %484 = vmatprep.mubr.f32.mxu0 0.0
    %485 = vmatmul.mubr.f32.gmra.mxu0 %v407
    %v486 = vpop.f32.mrf.mxu0
    %v487 = vadd.f32 0.0, %v486
    %v488 = vpop.f32.mrf.mxu0
    %489 = vmatprep.mubr.f32.mxu0 0.0
    %490 = vmatmul.mubr.f32.gmra.mxu0 %v410
    %v491 = vpop.f32.mrf.mxu0
    %v492 = vadd.f32 0.0, %v491
    %v493 = vpop.f32.mrf.mxu0
    %494 = vmatprep.mubr.f32.mxu0 0.0
    %495 = vmatmul.mubr.f32.gmra.mxu0 %v413
    %v496 = vpop.f32.mrf.mxu0
    %v497 = vadd.f32 0.0, %v496
    %v498 = vpop.f32.mrf.mxu0
    %499 = vdwg.mxu0
    %502 = vrot.lane.b32.xlu0 %v492, 96
    %v503 = vpop.permute.xlu0 %502
    %504 = vrot.lane.b32.xlu0 %v497, 96
    %v505 = vpop.permute.xlu0 %504
    %v508 = vsub.f32 %v482, %v503
    %v509 = vsub.f32 %v487, %v505
    %510 = vrot.lane.b32.xlu0 %v492, 32
    %v511 = vpop.permute.xlu0 %510
    %512 = vrot.lane.b32.xlu0 %v497, 32
    %v513 = vpop.permute.xlu0 %512
    %v516 = vadd.f32 %v482, %v511
    %v517 = vadd.f32 %v487, %v513
    %v518 = vsel %vm48, %v508, %v516
    %v519 = vsel %vm48, %v509, %v517
    %vm520 = vcmask 523264
    %v522 = vsel %vm520, %v518, 0
    %v525 = vsel %vm520, %v519, 0
    %527 = vmatprep.subr.mxu0 0.0
    %528 = vmatpush1.msra.mxu0 0.0
    %529 = vmatprep.subr.mxu0 0.0
    %530 = vmatpush1.msra.mxu0 0.0
    %531 = vmatprep.subr.mxu0 0.0
    %532 = vmatpush1.msra.mxu0 0.0
    %533 = vmatprep.subr.mxu0 0.0
    %534 = vmatpush1.msra.mxu0 0.0
    %535 = vmatprep.subr.mxu0 0.0
    %536 = vmatpush1.msra.mxu0 0.0
    %537 = vmatprep.subr.mxu0 0.0
    %538 = vmatpush1.msra.mxu0 0.0
    %539 = vmatprep.subr.mxu0 0.0
    %540 = vmatpush1.msra.mxu0 0.0
    %541 = vmatprep.subr.mxu0 0.0
    %542 = vmatpush1.msra.mxu0 0.0
    %543 = vmatprep.subr.mxu0 0.0
    %544 = vmatpush1.msra.mxu0 %v47
    %545 = vmatprep.subr.mxu0 0.0
    %546 = vmatpush1.msra.mxu0 %v46
    %547 = vmatprep.subr.mxu0 0.0
    %548 = vmatpush1.msra.mxu0 %v45
    %549 = vmatprep.subr.mxu0 0.0
    %550 = vmatpush1.msra.mxu0 %v44
    %551 = vmatprep.subr.mxu0 0.0
    %552 = vmatpush1.msra.mxu0 %v43
    %553 = vmatprep.subr.mxu0 0.0
    %554 = vmatpush1.msra.mxu0 %v42
    %555 = vmatprep.subr.mxu0 0.0
    %556 = vmatpush1.msra.mxu0 %v41
    %557 = vmatprep.subr.mxu0 0.0
    %558 = vmatpush1.msra.mxu0 %v40
    %559 = vmatprep.subr.mxu0 0.0
    %560 = vmatpush2.msra.mxu0 0.0
    %561 = vmatprep.subr.mxu0 0.0
    %562 = vmatpush2.msra.mxu0 0.0
    %563 = vmatprep.subr.mxu0 0.0
    %564 = vmatpush2.msra.mxu0 0.0
    %565 = vmatprep.subr.mxu0 0.0
    %566 = vmatpush2.msra.mxu0 0.0
    %567 = vmatprep.subr.mxu0 0.0
    %568 = vmatpush2.msra.mxu0 0.0
    %569 = vmatprep.subr.mxu0 0.0
    %570 = vmatpush2.msra.mxu0 0.0
    %571 = vmatprep.subr.mxu0 0.0
    %572 = vmatpush2.msra.mxu0 0.0
    %573 = vmatprep.subr.mxu0 0.0
    %574 = vmatpush2.msra.mxu0 0.0
    %575 = vmatprep.subr.mxu0 0.0
    %576 = vmatpush2.msra.mxu0 0.0
    %577 = vmatprep.subr.mxu0 0.0
    %578 = vmatpush2.msra.mxu0 0.0
    %579 = vmatprep.subr.mxu0 0.0
    %580 = vmatpush2.msra.mxu0 0.0
    %581 = vmatprep.subr.mxu0 0.0
    %582 = vmatpush2.msra.mxu0 0.0
    %583 = vmatprep.subr.mxu0 0.0
    %584 = vmatpush2.msra.mxu0 0.0
    %585 = vmatprep.subr.mxu0 0.0
    %586 = vmatpush2.msra.mxu0 0.0
    %587 = vmatprep.subr.mxu0 0.0
    %588 = vmatpush2.msra.mxu0 0.0
    %589 = vmatprep.subr.mxu0 0.0
    %590 = vmatpush2.msra.mxu0 0.0
    %591 = vmatprep.mubr.f32.mxu0 0.0
    %592 = vmatmul.mubr.f32.gmra.mxu0 %v522
    %v593 = vpop.f32.mrf.mxu0
    %v594 = vadd.f32 0.0, %v593
    %v595 = vpop.f32.mrf.mxu0
    %596 = vmatprep.mubr.f32.mxu0 0.0
    %597 = vmatmul.mubr.f32.gmra.mxu0 %v525
    %v598 = vpop.f32.mrf.mxu0
    %v599 = vadd.f32 0.0, %v598
    %v600 = vpop.f32.mrf.mxu0
    %601 = vdwg.mxu0
    %vm602 = vcmask 130048
    %603 = vst.msk [vmem:[#allocation2] sm:$0xff] %vm602, %v594
    %604 = vst.msk [vmem:[#allocation2 + $0x8] sm:$0xff] %vm602, %v599
    // Predicated region
    $region10: #{tpu_custom_call.1} parent=1 // pred_check
      _
    $region11: #{tpu_custom_call.1} parent=1 // pred_check_branch
      %606 = sbr.rel (0) target = $region13
    $region12: #{tpu_custom_call.1} parent=1 // pred_region
      %s608 = ssub.s32 256, 256
      %609 = vsyncadd [#allocation3], %s608
      %s610 = sshll.u32 [#allocation2], 4
      %s611 = int_to_ptr.vmem [resolvable:$true] %s610
      %616 = dma.vmem_to_hbm [thread:$0]  %s611, 256, %s2, [#allocation3], 128, 128, 8
    $region13: #{tpu_custom_call.1} parent=1 // pred_fallthru
      _
    // Predicated region
    $region14: #{tpu_custom_call.1} parent=1 // pred_check
      _
    $region15: #{tpu_custom_call.1} parent=1 // pred_check_branch
      %618 = sbr.rel (0) target = $region17
    $region16: #{tpu_custom_call.1} parent=1 // pred_region
      %619 = dma.done [#allocation3], 256
    $region17: #{tpu_custom_call.1} parent=1 // pred_fallthru
      _
    %620 = vsyncpa [#allocation3], 1

</llo_original>
